<compile_context>
chip_gen: v5e
topology: v5e:2x2
jax: 0.10.0
libtpu: 0.0.40
codegen_flags: <defaults>
</compile_context>

<pallas_src>
from functools import lru_cache

import jax
import jax.numpy as jnp
from jax import lax
from jax.experimental import pallas as pl
from jax.experimental.pallas import tpu as pltpu

IGNORE_INDEX = 255
LANES = 128
_TARGET_STEP_BYTES = 12 << 20   # double-buffered input blocks + scratch per grid step
_VMEM_LIMIT_BYTES = 32 << 20    # explicit scoped-VMEM limit (safe on v5e/v6e/v7x)


def _plan_tiles(hw, bytes_per_row):
    """Pick (hw_pad, rows, sublane_tile) for the dense (rows, 128) pixel layout.

    bytes_per_row = VMEM bytes consumed per sublane-row of 128 pixels
    (double-buffered inputs + scratch).  Returns a tiling where every grid
    step processes a full (Sb, 128) tile (Sb multiple of 8, or the full dim).
    """
    rows0 = -(-hw // LANES)                                   # ceil(hw / 128)
    budget = max(8, int(_TARGET_STEP_BYTES // bytes_per_row) // 8 * 8)
    if rows0 <= budget:
        return rows0 * LANES, rows0, rows0                    # one full-dim tile
    sb = budget                                               # multiple of 8
    rows = ((rows0 + sb - 1) // sb) * sb                      # pad to whole tiles
    return rows * LANES, rows, sb


# ---------------------------------------------------------------------------
# Segmentation: CrossEntropyLoss(ignore_index=255), mean over valid pixels.
# Logits block (1, C, Sb, 128); labels block (1, Sb, 128); pixels dense.
# ---------------------------------------------------------------------------
def _make_ce_kernel(C):
    def kernel(logits_ref, labels_ref, sum_ref, cnt_ref, acc_ref, cnt_acc_ref):
        j = pl.program_id(1)

        @pl.when(j == 0)
        def _():
            acc_ref[...] = jnp.zeros_like(acc_ref)
            cnt_acc_ref[...] = jnp.zeros_like(cnt_acc_ref)

        labels = labels_ref[0]                                  # (Sb, 128) int32

        # Channel reduction as C unrolled dense element-wise ops.
        x0 = logits_ref[0, 0].astype(jnp.float32)               # (Sb, 128)
        m = x0
        for c in range(1, C):
            m = jnp.maximum(m, logits_ref[0, c].astype(jnp.float32))

        se = jnp.exp(x0 - m)
        tgt = jnp.where(labels == 0, x0, 0.0)
        for c in range(1, C):
            xc = logits_ref[0, c].astype(jnp.float32)
            se = se + jnp.exp(xc - m)
            tgt = tgt + jnp.where(labels == c, xc, 0.0)
        lse = jnp.log(se) + m                                   # (Sb, 128)
        valid = (labels != IGNORE_INDEX).astype(jnp.float32)    # (Sb, 128)

        acc_ref[...] = acc_ref[...] + (lse - tgt) * valid
        cnt_acc_ref[...] = cnt_acc_ref[...] + valid

        @pl.when(j == pl.num_programs(1) - 1)
        def _():
            sum_ref[0] = jnp.sum(acc_ref[...], keepdims=True)   # (1, 1) per batch n
            cnt_ref[0] = jnp.sum(cnt_acc_ref[...], keepdims=True)

    return kernel


@lru_cache(maxsize=None)
def _build_ce(N, C, H, W, logits_dtype, labels_dtype):
    HW = H * W
    in_isz = jnp.dtype(logits_dtype).itemsize
    # double-buffered logits + labels(int32) blocks + two f32 scratch rows
    bytes_per_row = 2 * (C * LANES * in_isz + LANES * 4) + 2 * LANES * 4
    HW_pad, R, Sb = _plan_tiles(HW, bytes_per_row)
    num_tiles = R // Sb

    call = pl.pallas_call(
        _make_ce_kernel(C),
        out_shape=(jax.ShapeDtypeStruct((N, 1, 1), jnp.float32),
                   jax.ShapeDtypeStruct((N, 1, 1), jnp.float32)),
        grid_spec=pltpu.PrefetchScalarGridSpec(
            num_scalar_prefetch=0,
            grid=(N, num_tiles),
            in_specs=[pl.BlockSpec((1, C, Sb, LANES), lambda n, j: (n, 0, j, 0)),
                      pl.BlockSpec((1, Sb, LANES), lambda n, j: (n, j, 0))],
            out_specs=(pl.BlockSpec((1, 1, 1), lambda n, j: (n, 0, 0)),
                       pl.BlockSpec((1, 1, 1), lambda n, j: (n, 0, 0))),
            scratch_shapes=[pltpu.VMEM((Sb, LANES), jnp.float32),
                            pltpu.VMEM((Sb, LANES), jnp.float32)]),
        compiler_params=pltpu.CompilerParams(
            dimension_semantics=("parallel", "arbitrary"),
            vmem_limit_bytes=_VMEM_LIMIT_BYTES),
    )

    @jax.jit
    def fn(logits_nchw, labels_nhw):
        logits = logits_nchw.reshape(N, C, HW)        # reshape only, no transpose/cast
        labels = labels_nhw.reshape(N, HW)
        if labels.dtype != jnp.int32:
            labels = labels.astype(jnp.int32)
        if HW_pad != HW:                               # rare ragged case only
            pad = HW_pad - HW
            logits = jnp.pad(logits, ((0, 0), (0, 0), (0, pad)))
            labels = jnp.pad(labels, ((0, 0), (0, pad)),
                             constant_values=IGNORE_INDEX)
        logits = logits.reshape(N, C, R, LANES)
        labels = labels.reshape(N, R, LANES)
        s, c = call(logits, labels)
        return jnp.sum(s) / jnp.sum(c)                 # NaN if no valid pixel (torch-like)

    return fn


def cross_entropy_ignore(logits_nchw, labels_nhw):
    N, C, H, W = logits_nchw.shape
    return _build_ce(N, C, H, W, str(logits_nchw.dtype),
                     str(labels_nhw.dtype))(logits_nchw, labels_nhw)


# ---------------------------------------------------------------------------
# Normal task: mean (1 - cosine_similarity(pred, gt)) over all pixels.
# TODO(synk): `normal_loss` is referenced but never defined in the source
#             module; we implement the standard 1 - cosine-similarity loss.
# ---------------------------------------------------------------------------
def _make_normal_kernel(C):
    def kernel(pred_ref, gt_ref, out_ref, acc_ref):
        j = pl.program_id(1)

        @pl.when(j == 0)
        def _():
            acc_ref[...] = jnp.zeros_like(acc_ref)

        p0 = pred_ref[0, 0].astype(jnp.float32)        # dense (Sb, 128) planes
        g0 = gt_ref[0, 0].astype(jnp.float32)
        dot = p0 * g0
        pp = p0 * p0
        gg = g0 * g0
        for c in range(1, C):
            pc = pred_ref[0, c].astype(jnp.float32)
            gc = gt_ref[0, c].astype(jnp.float32)
            dot = dot + pc * gc
            pp = pp + pc * pc
            gg = gg + gc * gc
        # 1/max(||v||,1e-8) == rsqrt(max(||v||^2,1e-16)); rsqrt runs on the EUP.
        cos = dot * lax.rsqrt(jnp.maximum(pp, 1e-16)) * lax.rsqrt(jnp.maximum(gg, 1e-16))
        acc_ref[...] = acc_ref[...] + (1.0 - cos)

        @pl.when(j == pl.num_programs(1) - 1)
        def _():
            out_ref[0] = jnp.sum(acc_ref[...], keepdims=True)   # (1, 1) per batch n

    return kernel


@lru_cache(maxsize=None)
def _build_normal(N, C, H, W, dtype):
    HW = H * W
    isz = jnp.dtype(dtype).itemsize
    # double-buffered pred+gt blocks + one f32 scratch row
    bytes_per_row = 2 * (2 * C * LANES * isz) + LANES * 4
    HW_pad, R, Sb = _plan_tiles(HW, bytes_per_row)
    num_tiles = R // Sb
    pad_pixels = HW_pad - HW            # each zero-padded pixel contributes exactly 1.0

    call = pl.pallas_call(
        _make_normal_kernel(C),
        out_shape=jax.ShapeDtypeStruct((N, 1, 1), jnp.float32),
        grid_spec=pltpu.PrefetchScalarGridSpec(
            num_scalar_prefetch=0,
            grid=(N, num_tiles),
            in_specs=[pl.BlockSpec((1, C, Sb, LANES), lambda n, j: (n, 0, j, 0)),
                      pl.BlockSpec((1, C, Sb, LANES), lambda n, j: (n, 0, j, 0))],
            out_specs=pl.BlockSpec((1, 1, 1), lambda n, j: (n, 0, 0)),
            scratch_shapes=[pltpu.VMEM((Sb, LANES), jnp.float32)]),
        compiler_params=pltpu.CompilerParams(
            dimension_semantics=("parallel", "arbitrary"),
            vmem_limit_bytes=_VMEM_LIMIT_BYTES),
    )

    @jax.jit
    def fn(pred_nchw, gt_nchw):
        p = pred_nchw.reshape(N, C, HW)               # reshape only, no transpose/cast
        g = gt_nchw.reshape(N, C, HW)
        if pad_pixels:                                # rare ragged case only
            p = jnp.pad(p, ((0, 0), (0, 0), (0, pad_pixels)))
            g = jnp.pad(g, ((0, 0), (0, 0), (0, pad_pixels)))
        p = p.reshape(N, C, R, LANES)
        g = g.reshape(N, C, R, LANES)
        s = call(p, g)
        total = jnp.sum(s) - jnp.float32(N * pad_pixels)   # remove exact pad contribution
        return total / jnp.float32(N * HW)

    return fn


def normal_loss(pred_nchw, gt_nchw):
    N, C, H, W = pred_nchw.shape
    return _build_normal(N, C, H, W, str(pred_nchw.dtype))(pred_nchw, gt_nchw)


# ---------------------------------------------------------------------------
# MTLLosses equivalent
# ---------------------------------------------------------------------------
def get_losses(tasks_cfg):
    losses = {}
    for i, t in enumerate(tasks_cfg):
        if t == 'normal':
            losses[f'task_{i}'] = normal_loss
        elif t == 'seg':
            losses[f'task_{i}'] = cross_entropy_ignore
        else:
            raise NotImplementedError(f'[EE] Not implemented loss for task: {i}')
    return losses


class MTLLosses:
    def __init__(self, tasks, weight):
        self.tasks = tasks
        self.weight = weight
        self.losses = get_losses(tasks)
        self._jitted = jax.jit(self._forward)   # one jit for both losses + weighted sum

    def _forward(self, predictions, label):
        raw = {}
        weighted = []
        for t, _ in enumerate(self.tasks):
            _loss = self.losses[f'task_{t}'](predictions[f'task_{t}'],
                                             label[f'task_{t}'])
            raw[f'task_{t}'] = _loss
            weighted.append(self.weight[t] * _loss)
        return raw, sum(weighted)

    def __call__(self, predictions, label):
        raw, weighted_loss = self._jitted(predictions, label)
        host = jax.device_get(raw)              # single host sync for all .item()s
        loss = {k: float(v) for k, v in host.items()}
        loss['weighted_loss'] = weighted_loss   # device scalar (like the torch tensor)
        return loss


# ---------------------------------------------------------------------------
# Plain-JAX references for numerical sanity check
# ---------------------------------------------------------------------------
def _ref_ce(logits_nchw, labels_nhw):
    N, C, H, W = logits_nchw.shape
    lg = jnp.transpose(logits_nchw, (0, 2, 3, 1)).reshape(-1, C)
    lb = labels_nhw.reshape(-1)
    lse = jax.scipy.special.logsumexp(lg, axis=-1)
    tgt = jnp.take_along_axis(lg, jnp.clip(lb, 0, C - 1)[:, None], axis=-1)[:, 0]
    valid = (lb != IGNORE_INDEX).astype(jnp.float32)
    return jnp.sum((lse - tgt) * valid) / jnp.sum(valid)


def _ref_normal(p_nchw, g_nchw):
    p = jnp.transpose(p_nchw, (0, 2, 3, 1)).reshape(-1, 3)
    g = jnp.transpose(g_nchw, (0, 2, 3, 1)).reshape(-1, 3)
    dot = jnp.sum(p * g, -1)
    pn = jnp.maximum(jnp.linalg.norm(p, axis=-1), 1e-8)
    gn = jnp.maximum(jnp.linalg.norm(g, axis=-1), 1e-8)
    return jnp.mean(1.0 - dot / (pn * gn))


if __name__ == "__main__":
    key = jax.random.PRNGKey(0)
    k1, k2, k3, k4, k5 = jax.random.split(key, 5)

    N, H, W = 2, 16, 16
    num_classes = 4

    # task_0: surface normals, pred/label (N, 3, H, W)
    pred_normal = jax.random.normal(k1, (N, 3, H, W), dtype=jnp.float32)
    gt_normal = jax.random.normal(k2, (N, 3, H, W), dtype=jnp.float32)

    # task_1: segmentation, logits (N, C, H, W), labels (N, H, W) with some 255s
    seg_logits = jax.random.normal(k3, (N, num_classes, H, W), dtype=jnp.float32)
    seg_labels = jax.random.randint(k4, (N, H, W), 0, num_classes, dtype=jnp.int32)
    ignore_mask = jax.random.bernoulli(k5, 0.1, (N, H, W))
    seg_labels = jnp.where(ignore_mask, IGNORE_INDEX, seg_labels)

    predictions = {'task_0': pred_normal, 'task_1': seg_logits}
    labels = {'task_0': gt_normal, 'task_1': seg_labels}

    mtl = MTLLosses(tasks=['normal', 'seg'], weight=[1.0, 0.5])
    out = mtl(predictions, labels)
    jax.block_until_ready(out['weighted_loss'])

    # sanity check against plain-JAX references
    ref0 = float(_ref_normal(pred_normal, gt_normal))
    ref1 = float(_ref_ce(seg_logits, seg_labels))
    assert abs(out['task_0'] - ref0) < 1e-4, (out['task_0'], ref0)
    assert abs(out['task_1'] - ref1) < 1e-4, (out['task_1'], ref1)
    ref_w = 1.0 * ref0 + 0.5 * ref1
    assert abs(float(out['weighted_loss']) - ref_w) < 1e-4

    # ragged-shape check exercising the wrapper pad path (H*W not a multiple of 128)
    Hr, Wr = 10, 12
    pr = jax.random.normal(k1, (N, 3, Hr, Wr), dtype=jnp.float32)
    gr = jax.random.normal(k2, (N, 3, Hr, Wr), dtype=jnp.float32)
    lg = jax.random.normal(k3, (N, num_classes, Hr, Wr), dtype=jnp.float32)
    lb = jax.random.randint(k4, (N, Hr, Wr), 0, num_classes, dtype=jnp.int32)
    assert abs(float(normal_loss(pr, gr)) - float(_ref_normal(pr, gr))) < 1e-4
    assert abs(float(cross_entropy_ignore(lg, lb)) - float(_ref_ce(lg, lb))) < 1e-4

    print("KERNEL_OK")
</pallas_src>

<mosaic_0001>
module attributes {stable_mosaic.version = 11 : i64} {
  func.func @kernel(%arg0: i32, %arg1: i32, %arg2: memref<1x3x2x128xf32, #tpu.memory_space<vmem>>, %arg3: memref<1x3x2x128xf32, #tpu.memory_space<vmem>>, %arg4: memref<1x1x1xf32, #tpu.memory_space<vmem>>, %arg5: memref<2x128xf32, #tpu.memory_space<vmem>>) attributes {dimension_semantics = [#tpu.dimension_semantics<parallel>, #tpu.dimension_semantics<arbitrary>], iteration_bounds = array<i64: 2, 1>, scalar_prefetch = 0 : i64, scratch_operands = 1 : i64, tpu.core_type = #tpu.core_type<tc>, window_params = [{transform_indices = @transform_0, window_bounds = array<i64: 1, 3, 2, 128>}, {transform_indices = @transform_1, window_bounds = array<i64: 1, 3, 2, 128>}, {transform_indices = @transform_2, window_bounds = array<i64: 1, 1, 1>}]} {
    %c0_i32 = arith.constant 0 : i32
    %0 = arith.cmpi eq, %arg1, %c0_i32 : i32
    %1 = arith.extui %0 : i1 to i32
    %c0_i32_0 = arith.constant 0 : i32
    %2 = arith.cmpi ne, %1, %c0_i32_0 : i32
    scf.if %2 {
      %cst_30 = arith.constant 0.000000e+00 : f32
      %46 = vector.broadcast %cst_30 : f32 to vector<2x128xf32>
      %c0_31 = arith.constant 0 : index
      %c0_32 = arith.constant 0 : index
      %47 = vector.load %arg5[%c0_31, %c0_32] : memref<2x128xf32, #tpu.memory_space<vmem>>, vector<2x128xf32>
      tpu.vector_store %arg5[%c0_31, %c0_32], %46 {strides = array<i32>} : memref<2x128xf32, #tpu.memory_space<vmem>>, vector<2x128xf32>,
    } else {
    }
    %c0 = arith.constant 0 : index
    %c0_1 = arith.constant 0 : index
    %c0_2 = arith.constant 0 : index
    %c0_3 = arith.constant 0 : index
    %3 = vector.load %arg2[%c0, %c0_1, %c0_2, %c0_3] : memref<1x3x2x128xf32, #tpu.memory_space<vmem>>, vector<1x1x2x128xf32>
    %4 = vector.shape_cast %3 : vector<1x1x2x128xf32> to vector<2x128xf32>
    %c0_4 = arith.constant 0 : index
    %c0_5 = arith.constant 0 : index
    %c0_6 = arith.constant 0 : index
    %c0_7 = arith.constant 0 : index
    %5 = vector.load %arg3[%c0_4, %c0_5, %c0_6, %c0_7] : memref<1x3x2x128xf32, #tpu.memory_space<vmem>>, vector<1x1x2x128xf32>
    %6 = vector.shape_cast %5 : vector<1x1x2x128xf32> to vector<2x128xf32>
    %7 = arith.mulf %4, %6 : vector<2x128xf32>
    %8 = arith.mulf %4, %4 : vector<2x128xf32>
    %9 = arith.mulf %6, %6 : vector<2x128xf32>
    %c0_8 = arith.constant 0 : index
    %c1 = arith.constant 1 : index
    %c0_9 = arith.constant 0 : index
    %c0_10 = arith.constant 0 : index
    %10 = vector.load %arg2[%c0_8, %c1, %c0_9, %c0_10] : memref<1x3x2x128xf32, #tpu.memory_space<vmem>>, vector<1x1x2x128xf32>
    %11 = vector.shape_cast %10 : vector<1x1x2x128xf32> to vector<2x128xf32>
    %c0_11 = arith.constant 0 : index
    %c1_12 = arith.constant 1 : index
    %c0_13 = arith.constant 0 : index
    %c0_14 = arith.constant 0 : index
    %12 = vector.load %arg3[%c0_11, %c1_12, %c0_13, %c0_14] : memref<1x3x2x128xf32, #tpu.memory_space<vmem>>, vector<1x1x2x128xf32>
    %13 = vector.shape_cast %12 : vector<1x1x2x128xf32> to vector<2x128xf32>
    %14 = arith.mulf %11, %13 : vector<2x128xf32>
    %15 = arith.addf %7, %14 : vector<2x128xf32>
    %16 = arith.mulf %11, %11 : vector<2x128xf32>
    %17 = arith.addf %8, %16 : vector<2x128xf32>
    %18 = arith.mulf %13, %13 : vector<2x128xf32>
    %19 = arith.addf %9, %18 : vector<2x128xf32>
    %c0_15 = arith.constant 0 : index
    %c2 = arith.constant 2 : index
    %c0_16 = arith.constant 0 : index
    %c0_17 = arith.constant 0 : index
    %20 = vector.load %arg2[%c0_15, %c2, %c0_16, %c0_17] : memref<1x3x2x128xf32, #tpu.memory_space<vmem>>, vector<1x1x2x128xf32>
    %21 = vector.shape_cast %20 : vector<1x1x2x128xf32> to vector<2x128xf32>
    %c0_18 = arith.constant 0 : index
    %c2_19 = arith.constant 2 : index
    %c0_20 = arith.constant 0 : index
    %c0_21 = arith.constant 0 : index
    %22 = vector.load %arg3[%c0_18, %c2_19, %c0_20, %c0_21] : memref<1x3x2x128xf32, #tpu.memory_space<vmem>>, vector<1x1x2x128xf32>
    %23 = vector.shape_cast %22 : vector<1x1x2x128xf32> to vector<2x128xf32>
    %24 = arith.mulf %21, %23 : vector<2x128xf32>
    %25 = arith.addf %15, %24 : vector<2x128xf32>
    %26 = arith.mulf %21, %21 : vector<2x128xf32>
    %27 = arith.addf %17, %26 : vector<2x128xf32>
    %28 = arith.mulf %23, %23 : vector<2x128xf32>
    %29 = arith.addf %19, %28 : vector<2x128xf32>
    %cst = arith.constant 1.000000e-16 : f32
    %30 = vector.broadcast %cst : f32 to vector<2x128xf32>
    %31 = arith.maximumf %27, %30 : vector<2x128xf32>
    %32 = math.rsqrt %31 : vector<2x128xf32>
    %33 = arith.mulf %25, %32 : vector<2x128xf32>
    %cst_22 = arith.constant 1.000000e-16 : f32
    %34 = vector.broadcast %cst_22 : f32 to vector<2x128xf32>
    %35 = arith.maximumf %29, %34 : vector<2x128xf32>
    %36 = math.rsqrt %35 : vector<2x128xf32>
    %37 = arith.mulf %33, %36 : vector<2x128xf32>
    %c0_23 = arith.constant 0 : index
    %c0_24 = arith.constant 0 : index
    %38 = vector.load %arg5[%c0_23, %c0_24] : memref<2x128xf32, #tpu.memory_space<vmem>>, vector<2x128xf32>
    %cst_25 = arith.constant 1.000000e+00 : f32
    %39 = vector.broadcast %cst_25 : f32 to vector<2x128xf32>
    %40 = arith.subf %39, %37 : vector<2x128xf32>
    %41 = arith.addf %38, %40 : vector<2x128xf32>
    %c0_26 = arith.constant 0 : index
    %c0_27 = arith.constant 0 : index
    %42 = vector.load %arg5[%c0_26, %c0_27] : memref<2x128xf32, #tpu.memory_space<vmem>>, vector<2x128xf32>
    tpu.vector_store %arg5[%c0_26, %c0_27], %41 {strides = array<i32>} : memref<2x128xf32, #tpu.memory_space<vmem>>, vector<2x128xf32>,
    %c0_i32_28 = arith.constant 0 : i32
    %43 = arith.cmpi eq, %arg1, %c0_i32_28 : i32
    %44 = arith.extui %43 : i1 to i32
    %c0_i32_29 = arith.constant 0 : i32
    %45 = arith.cmpi ne, %44, %c0_i32_29 : i32
    scf.if %45 {
      %c0_30 = arith.constant 0 : index
      %c0_31 = arith.constant 0 : index
      %46 = vector.load %arg5[%c0_30, %c0_31] : memref<2x128xf32, #tpu.memory_space<vmem>>, vector<2x128xf32>
      %47 = vector.shape_cast %46 : vector<2x128xf32> to vector<1x2x128xf32>
      %cst_32 = arith.constant dense<0.000000e+00> : vector<1xf32>
      %48 = vector.multi_reduction <add>, %47, %cst_32 [1, 2] : vector<1x2x128xf32> to vector<1xf32>
      %49 = vector.shape_cast %48 : vector<1xf32> to vector<1x1x1xf32>
      %50 = vector.extract %49[0, 0, 0] : f32 from vector<1x1x1xf32>
      %51 = vector.broadcast %50 : f32 to vector<1x1xf32>
      %c0_33 = arith.constant 0 : index
      %c0_34 = arith.constant 0 : index
      %c0_35 = arith.constant 0 : index
      %52 = vector.load %arg4[%c0_33, %c0_34, %c0_35] : memref<1x1x1xf32, #tpu.memory_space<vmem>>, vector<1x1x1xf32>
      %53 = vector.shape_cast %52 : vector<1x1x1xf32> to vector<1x1xf32>
      %54 = vector.shape_cast %51 : vector<1x1xf32> to vector<1x1x1xf32>
      tpu.vector_store %arg4[%c0_33, %c0_34, %c0_35], %54 {strides = array<i32>} : memref<1x1x1xf32, #tpu.memory_space<vmem>>, vector<1x1x1xf32>,
    } else {
    }
    return
  }
  func.func @transform_0(%arg0: i32, %arg1: i32) -> (i32, i32, i32, i32) {
    %c0_i32 = arith.constant 0 : i32
    %c0_i32_0 = arith.constant 0 : i32
    %c0_i32_1 = arith.constant 0 : i32
    return %arg0, %c0_i32, %arg1, %c0_i32_0 : i32, i32, i32, i32
  }
  func.func @transform_1(%arg0: i32, %arg1: i32) -> (i32, i32, i32, i32) {
    %c0_i32 = arith.constant 0 : i32
    %c0_i32_0 = arith.constant 0 : i32
    %c0_i32_1 = arith.constant 0 : i32
    return %arg0, %c0_i32, %arg1, %c0_i32_0 : i32, i32, i32, i32
  }
  func.func @transform_2(%arg0: i32, %arg1: i32) -> (i32, i32, i32) {
    %c0_i32 = arith.constant 0 : i32
    %c0_i32_0 = arith.constant 0 : i32
    %c0_i32_1 = arith.constant 0 : i32
    return %arg0, %c0_i32, %c0_i32_0 : i32, i32, i32
  }
}

</mosaic_0001>

<llo_original>
// kernel: fn.1
$region0: #{fn.1}
  #allocation0 [shape = 'u32[]', space=smem, size = 0x4, offset = 0x4, fixed_abs, tag = 'smem constant byte address 0x4 - core index']
  #allocation1 [shape = 'u32[72,128]{1,0:T(1,128)}', space=vmem, size = 0x9000, scoped, tag = 'internal scratch']
  #allocation2 [shape = 'f32[2,128]{1,0:T(2,128)}', space=vmem, size = 0x400, scoped, tag = 'scratch operand']
  %s0 = inlined_call_operand.vmem [shape: f32[2,3,2,128], index: 0, kind: input, shape index: {}]
  %s1 = inlined_call_operand.vmem [shape: f32[2,3,2,128], index: 1, kind: input, shape index: {}]
  %s2 = inlined_call_operand.vmem [shape: f32[2,1,1], index: 2, kind: output, shape index: {}]
  %s3 = sld [smem:[#allocation0]]
  $region49: #{fn.1} parent=0
    _
  %s5 = ssub.s32 1, %s3
  %s6 = scalar_select 0, %s5, %s3
  loop: start=0, step=1, limit=4
  $region2: #{fn.1} parent=0 // loop_pre_header
    _
  $region3: #{fn.1} parent=0 // loop_header
    %s8 = sphi 0, %s12
    %p9 = scmp.ge.s32.totalorder %s8, 4
    %s15 = sphi 0, %s27
    %s16 = sphi 0, %s23
    %s17 = sphi 0, %s15
    %s18 = sphi 0, %s16
    %s19 = sphi 0, %s17
    %s20 = sphi 0, %s18
    %s32 = sphi 0, %s34
    %s35 = sphi 0, %s32
    %s36 = sphi 0, %s35
    %s52 = sphi 0, %s36
    %s60 = sphi 0, %s62
    %s63 = sphi 0, %s60
    %s64 = sphi 0, %s63
    %s80 = sphi 0, %s64
    %s86 = sphi 0, %s88
    %s89 = sphi 0, %s86
    %s90 = sphi 0, %s89
    %s106 = sphi 0, %s90
  $region4: #{fn.1} parent=0 // loop_header_branch
    %11 = sbr.rel (%p9) target = $region8
  $region5: #{fn.1} parent=0 // loop_body
    %s13 = ssub.s32 %s8, 1
    %s14 = ssub.s32 %s8, 2
    %s21 = sadd.s32 1, %s16
    %p22 = scmp.ge.s32.totalorder %s21, 1
    %s23 = scalar_select %p22, 0, %s21
    %s24 = sadd.s32 1, %s15
    %s25 = scalar_select %p22, %s24, %s15
    %p26 = scmp.ge.s32.totalorder %s25, 2
    %s27 = scalar_select %p26, 0, %s25
    %s28 = ssub.s32 %s15, %s27
    %s29 = ssub.s32 %s16, %s23
    %s30 = sor.u32 %s28, %s29
    %p31 = scmp.eq.s32.totalorder %s30, 0
    %s33 = sadd.s32 %s32, 1
    %s34 = scalar_select %p31, %s32, %s33
    %p37 = pneg %p31
    %p38 = scmp.eq.s32.totalorder %s8, 1
    %p39 = por %p37, %p38
    %p40 = scmp.ne.s32.totalorder %s32, %s35
    %p41 = scmp.eq.s32.totalorder %s8, 0
    %p42 = por %p40, %p41
    %p43 = scmp.ne.s32.totalorder %s32, %s35
    %p44 = scmp.eq.s32.totalorder %s13, 1
    %p45 = por %p43, %p44
    %p46 = scmp.ne.s32.totalorder %s35, %s36
    %p47 = scmp.eq.s32.totalorder %s13, 0
    %p48 = por %p46, %p47
    %p49 = scmp.ne.s32.totalorder %s35, %s36
    %p50 = scmp.eq.s32.totalorder %s14, 1
    %p51 = por %p49, %p50
    %p53 = scmp.ne.s32.totalorder %s36, %s52
    %p54 = scmp.eq.s32.totalorder %s14, 0
    %p55 = por %p53, %p54
    %s56 = ssub.s32 %s15, %s27
    %s57 = ssub.s32 %s16, %s23
    %s58 = sor.u32 %s56, %s57
    %p59 = scmp.eq.s32.totalorder %s58, 0
    %s61 = sadd.s32 %s60, 1
    %s62 = scalar_select %p59, %s60, %s61
    %p65 = pneg %p59
    %p66 = scmp.eq.s32.totalorder %s8, 1
    %p67 = por %p65, %p66
    %p68 = scmp.ne.s32.totalorder %s60, %s63
    %p69 = scmp.eq.s32.totalorder %s8, 0
    %p70 = por %p68, %p69
    %p71 = scmp.ne.s32.totalorder %s60, %s63
    %p72 = scmp.eq.s32.totalorder %s13, 1
    %p73 = por %p71, %p72
    %p74 = scmp.ne.s32.totalorder %s63, %s64
    %p75 = scmp.eq.s32.totalorder %s13, 0
    %p76 = por %p74, %p75
    %p77 = scmp.ne.s32.totalorder %s63, %s64
    %p78 = scmp.eq.s32.totalorder %s14, 1
    %p79 = por %p77, %p78
    %p81 = scmp.ne.s32.totalorder %s64, %s80
    %p82 = scmp.eq.s32.totalorder %s14, 0
    %p83 = por %p81, %p82
    %s84 = ssub.s32 %s15, %s27
    %p85 = scmp.eq.s32.totalorder %s84, 0
    %s87 = sadd.s32 %s86, 1
    %s88 = scalar_select %p85, %s86, %s87
    %p91 = pneg %p85
    %p92 = scmp.eq.s32.totalorder %s8, 1
    %p93 = por %p91, %p92
    %p94 = scmp.ne.s32.totalorder %s86, %s89
    %p95 = scmp.eq.s32.totalorder %s8, 0
    %p96 = por %p94, %p95
    %p97 = scmp.ne.s32.totalorder %s86, %s89
    %p98 = scmp.eq.s32.totalorder %s13, 1
    %p99 = por %p97, %p98
    %p100 = scmp.ne.s32.totalorder %s89, %s90
    %p101 = scmp.eq.s32.totalorder %s13, 0
    %p102 = por %p100, %p101
    %p103 = scmp.ne.s32.totalorder %s89, %s90
    %p104 = scmp.eq.s32.totalorder %s14, 1
    %p105 = por %p103, %p104
    %p107 = scmp.ne.s32.totalorder %s90, %s106
    %p108 = scmp.eq.s32.totalorder %s14, 0
    %p109 = por %p107, %p108
    %p110 = scmp.le.s32.totalorder 1, %s8
    %p111 = scmp.lt.s32.totalorder %s8, 3
    %p112 = pnand %p110, %p111
    %p113 = pneg %p112
    // Predicated region
    $region9: #{fn.1} parent=5 // pred_check
      _
    $region10: #{fn.1} parent=5 // pred_check_branch
      %115 = sbr.rel (%p112) target = $region12
    $region11: #{fn.1} parent=5 // pred_region
      %s116 = ssub.s32 %s8, 1
    $region12: #{fn.1} parent=5 // pred_fallthru
      _
    %p117 = scmp.lt.s32.totalorder %s8, 2
    // Predicated region
    $region13: #{fn.1} parent=5 // pred_check
      %p118 = pneg %p117
    $region14: #{fn.1} parent=5 // pred_check_branch
      %120 = sbr.rel (%p118) target = $region16
    $region15: #{fn.1} parent=5 // pred_region
      // Predicated region
      $region17: #{fn.1} parent=15 // pred_check
        %p121 = pneg %p42
      $region18: #{fn.1} parent=15 // pred_check_branch
        %123 = sbr.rel (%p121) target = $region20
      $region19: #{fn.1} parent=15 // pred_region
        %p124 = scmp.lt.s32.totalorder %s15, 1
        %s125 = scalar_select %p124, %s15, 1
        %p126 = scmp.lt.s32.totalorder %s16, 0
        %s127 = scalar_select %p126, %s16, 0
        %s128 = smul.addr %s125, 3
        %s129 = sadd.s32 %s127, %s128
        %s130 = smul.addr %s129, 2
        %s131 = scalar_lea.vmem %s0, %s130
      $region20: #{fn.1} parent=15 // pred_fallthru
        _
      // Predicated region
      $region21: #{fn.1} parent=15 // pred_check
        %p132 = pneg %p70
      $region22: #{fn.1} parent=15 // pred_check_branch
        %134 = sbr.rel (%p132) target = $region24
      $region23: #{fn.1} parent=15 // pred_region
        %p135 = scmp.lt.s32.totalorder %s15, 1
        %s136 = scalar_select %p135, %s15, 1
        %p137 = scmp.lt.s32.totalorder %s16, 0
        %s138 = scalar_select %p137, %s16, 0
        %s139 = smul.addr %s136, 3
        %s140 = sadd.s32 %s138, %s139
        %s141 = smul.addr %s140, 2
        %s142 = scalar_lea.vmem %s1, %s141
      $region24: #{fn.1} parent=15 // pred_fallthru
        _
    $region16: #{fn.1} parent=5 // pred_fallthru
      _
    %p143 = scmp.le.s32.totalorder 1, %s8
    %p144 = scmp.lt.s32.totalorder %s8, 3
    %p145 = pnand %p143, %p144
    %p146 = pneg %p145
    // Predicated region
    $region25: #{fn.1} parent=5 // pred_check
      _
    $region26: #{fn.1} parent=5 // pred_check_branch
      %148 = sbr.rel (%p145) target = $region28
    $region27: #{fn.1} parent=5 // pred_region
      %s149 = ssub.s32 %s8, 1
      %p150 = scmp.lt.s32.totalorder %s17, 1
      %s151 = scalar_select %p150, %s17, 1
      %p152 = scmp.lt.s32.totalorder %s18, 0
      %s153 = scalar_select %p152, %s18, 0
      %s154 = smul.addr %s151, 3
      %s155 = sadd.s32 %s153, %s154
      %s156 = smul.addr %s155, 2
      %s157 = scalar_lea.vmem %s0, %s156
      %p158 = pneg %p48
      %p159 = pneg %p45
      %p160 = scmp.lt.s32.totalorder %s17, 1
      %s161 = scalar_select %p160, %s17, 1
      %p162 = scmp.lt.s32.totalorder %s18, 0
      %s163 = scalar_select %p162, %s18, 0
      %s164 = smul.addr %s161, 3
      %s165 = sadd.s32 %s163, %s164
      %s166 = smul.addr %s165, 2
      %s167 = scalar_lea.vmem %s1, %s166
      %p168 = pneg %p76
      %p169 = pneg %p73
      %p170 = pneg %p102
      %p171 = pneg %p99
      %p172 = scmp.lt.s32.totalorder %s17, 1
      %s173 = scalar_select %p172, %s17, 1
      %s174 = scalar_lea.vmem %s2, %s173
      %p175 = scmp.lt.s32.totalorder %s17, 1
      %s176 = scalar_select %p175, %s17, 1
      %p177 = scmp.lt.s32.totalorder %s18, 0
      %s178 = scalar_select %p177, %s18, 0
      %s179 = smul.addr %s176, 3
      %s180 = sadd.s32 %s178, %s179
      %s181 = smul.addr %s180, 2
      %s182 = scalar_lea.vmem %s0, %s181
      %p183 = scmp.lt.s32.totalorder %s17, 1
      %s184 = scalar_select %p183, %s17, 1
      %p185 = scmp.lt.s32.totalorder %s18, 0
      %s186 = scalar_select %p185, %s18, 0
      %s187 = smul.addr %s184, 3
      %s188 = sadd.s32 %s186, %s187
      %s189 = smul.addr %s188, 2
      %s190 = scalar_lea.vmem %s1, %s189
      %p191 = scmp.lt.s32.totalorder %s17, 1
      %s192 = scalar_select %p191, %s17, 1
      %s193 = scalar_lea.vmem %s2, %s192
      %p194 = scmp.eq.s32.totalorder %s18, 0
      // Predicated region
      $region29: #{fn.1} parent=27 // pred_check
        %p195 = pneg %p194
      $region30: #{fn.1} parent=27 // pred_check_branch
        %197 = sbr.rel (%p195) target = $region32
      $region31: #{fn.1} parent=27 // pred_region
        %198 = vst [vmem:[#allocation2] sm:$0x3] 0.0
      $region32: #{fn.1} parent=27 // pred_fallthru
        _
      %v199 = vld [vmem:[%s182] sm:$0x3]
      %v200 = vld [vmem:[%s190] sm:$0x3]
      %v201 = vmul.f32 %v199, %v200
      %v202 = vmul.f32 %v199, %v199
      %v203 = vmul.f32 %v200, %v200
      %s204 = scalar_lea.vmem %s182, 2
      %v205 = vld [vmem:[%s204] sm:$0x3]
      %s206 = scalar_lea.vmem %s190, 2
      %v207 = vld [vmem:[%s206] sm:$0x3]
      %v208 = vmul.f32 %v205, %v207
      %v209 = vadd.f32 %v201, %v208
      %v210 = vmul.f32 %v205, %v205
      %v211 = vadd.f32 %v202, %v210
      %v212 = vmul.f32 %v207, %v207
      %v213 = vadd.f32 %v203, %v212
      %s214 = scalar_lea.vmem %s182, 4
      %v215 = vld [vmem:[%s214] sm:$0x3]
      %s216 = scalar_lea.vmem %s190, 4
      %v217 = vld [vmem:[%s216] sm:$0x3]
      %v218 = vmul.f32 %v215, %v217
      %v219 = vadd.f32 %v209, %v218
      %v220 = vmul.f32 %v215, %v215
      %v221 = vadd.f32 %v211, %v220
      %v222 = vmul.f32 %v217, %v217
      %v223 = vadd.f32 %v213, %v222
      %v224 = vmax.f32 %v221, 1e-16
      %v225 = vrsqrt.pop %v224
      %v226 = vmul.f32 %v225, %v224
      %v227 = vmul.f32 %v226, %v225
      %v228 = vmul.f32 0.5, %v227
      %v229 = vsub.f32 1.5, %v228
      %v230 = vmul.f32 %v225, %v229
      %vm231 = vweird.f32 %v224
      %vm232 = vweird.f32 %v225
      %vm233 = vmor %vm231, %vm232
      %v234 = vsel %vm233, %v225, %v230
      %v235 = vmul.f32 %v219, %v234
      %v236 = vmax.f32 %v223, 1e-16
      %v237 = vrsqrt.pop %v236
      %v238 = vmul.f32 %v237, %v236
      %v239 = vmul.f32 %v238, %v237
      %v240 = vmul.f32 0.5, %v239
      %v241 = vsub.f32 1.5, %v240
      %v242 = vmul.f32 %v237, %v241
      %vm243 = vweird.f32 %v236
      %vm244 = vweird.f32 %v237
      %vm245 = vmor %vm243, %vm244
      %v246 = vsel %vm245, %v237, %v242
      %v247 = vmul.f32 %v235, %v246
      %v248 = vld [vmem:[#allocation2] sm:$0x3]
      %v249 = vsub.f32 1.0, %v247
      %v250 = vadd.f32 %v248, %v249
      %251 = vst [vmem:[#allocation2] sm:$0x3] %v250
      // Predicated region
      $region33: #{fn.1} parent=27 // pred_check
        %p252 = pneg %p194
      $region34: #{fn.1} parent=27 // pred_check_branch
        %254 = sbr.rel (%p252) target = $region36
      $region35: #{fn.1} parent=27 // pred_region
        %v255 = vld [vmem:[#allocation2] sm:$0x3]
        %vm256 = vcmask 1041408
        %v257 = vsel %vm256, %v255, 0.0
        %258 = vadd.xlane.f32.xlu0 %v257
        %v259 = vpop.xlane.xlu0 %258
        %v260 = vrot.slane %v259, 4
        %v261 = vadd.f32 %v259, %v260
        %v262 = vrot.slane %v261, 2
        %v263 = vadd.f32 %v261, %v262
        %v264 = vrot.slane %v263, 1
        %v265 = vadd.f32 %v263, %v264
        %s266 = vtos %v265
        %v267 = vstv %s266
        %vm268 = vcmask 0
        %269 = vst.msk [vmem:[%s193] sm:$0x1] %vm268, %v267
      $region36: #{fn.1} parent=27 // pred_fallthru
        _
      %p270 = scmp.lt.s32.totalorder %s17, 1
      %s271 = scalar_select %p270, %s17, 1
      %s272 = scalar_lea.vmem %s2, %s271
      // Predicated region
      $region37: #{fn.1} parent=27 // pred_check
        %p273 = pneg %p99
      $region38: #{fn.1} parent=27 // pred_check_branch
        %275 = sbr.rel (%p273) target = $region40
      $region39: #{fn.1} parent=27 // pred_region
        _
      $region40: #{fn.1} parent=27 // pred_fallthru
        _
    $region28: #{fn.1} parent=5 // pred_fallthru
      _
    %p276 = scmp.le.s32.totalorder 2, %s8
    // Predicated region
    $region41: #{fn.1} parent=5 // pred_check
      %p277 = pneg %p276
    $region42: #{fn.1} parent=5 // pred_check_branch
      %279 = sbr.rel (%p277) target = $region44
    $region43: #{fn.1} parent=5 // pred_region
      %s280 = ssub.s32 %s8, 2
      // Predicated region
      $region45: #{fn.1} parent=43 // pred_check
        %p281 = pneg %p105
      $region46: #{fn.1} parent=43 // pred_check_branch
        %283 = sbr.rel (%p281) target = $region48
      $region47: #{fn.1} parent=43 // pred_region
        %p284 = scmp.lt.s32.totalorder %s19, 1
        %s285 = scalar_select %p284, %s19, 1
        %s286 = scalar_lea.vmem %s2, %s285
      $region48: #{fn.1} parent=43 // pred_fallthru
        _
    $region44: #{fn.1} parent=5 // pred_fallthru
      _
  $region6: #{fn.1} parent=0 // loop_footer
    %s12 = sadd.s32 1, %s8
  $region7: #{fn.1} parent=0 // loop_footer_branch
    %7 = sbr.rel target = $region3
  $region8: #{fn.1} parent=0 // loop_exit
    _

</llo_original>
